<compile_context>
chip_gen: v7x
topology: tpu7x:2x2x1
jax: 0.10.0
libtpu: 0.0.40
codegen_flags: <defaults>
</compile_context>

<pallas_src>
from functools import partial

import numpy as np
import jax
import jax.numpy as jnp
from jax import lax
from jax.experimental import pallas as pl
from jax.experimental.pallas import tpu as pltpu

EMBEDDING_DIM = 32
ENCODE_DIM = 32
VOCAB_SIZE = 16
C_PAD = 128          # lane-padded feature width (one full 128-lane vreg row)


def _round_up(x, m):
    return ((x + m - 1) // m) * m


# ----------------------- host-side tree flattening -------------------------

def flatten_tree(node, batch_index, plan, counter):
    """Mirrors BatchTreeEncoder.traverse_mul's index bookkeeping (host side)."""
    size = len(node)
    if not size:
        return None
    current_node = [node[i][0] for i in range(size)]
    children_index, children = [], []
    for i in range(size):
        temp = node[i][1:]
        for j in range(len(temp)):
            if temp[j][0] != -1:
                if len(children_index) <= j:
                    children_index.append([i])
                    children.append([temp[j]])
                else:
                    children_index[j].append(i)
                    children[j].append(temp[j])
    offset = counter[0]
    counter[0] += size
    call = {"offset": offset, "size": size, "tokens": current_node,
            "batch_index": list(batch_index), "children": []}
    for c in range(len(children)):
        bci = [batch_index[i] for i in children_index[c]]
        child = flatten_tree(children[c], bci, plan, counter)
        if child is not None:
            call["children"].append((children_index[c], child))
    plan.append(call)   # post-order: children appended (and processed) before parent
    return call


def build_tables(x, bs):
    """Flatten the recursive traversal into flat int32 tables for the kernel."""
    plan, counter = [], [0]
    flatten_tree(x, list(range(bs)), plan, counter)
    n_nodes = counter[0]
    n_levels = len(plan)

    tokens = np.zeros((n_nodes,), np.int32)
    node_batch = np.zeros((n_nodes,), np.int32)
    lvl_off = np.zeros((n_levels,), np.int32)
    lvl_sz = np.zeros((n_levels,), np.int32)
    e_start = np.zeros((n_levels,), np.int32)
    e_cnt = np.zeros((n_levels,), np.int32)
    edge_dst_l, edge_src_l = [], []
    present = np.zeros((bs,), np.int64)

    for l, call in enumerate(plan):
        off, size = call["offset"], call["size"]
        lvl_off[l], lvl_sz[l] = off, size
        tokens[off:off + size] = np.asarray(call["tokens"], np.int32)
        node_batch[off:off + size] = np.asarray(call["batch_index"], np.int32)
        for b in call["batch_index"]:
            present[b] += 1
        e_start[l] = len(edge_dst_l)
        for child_idx, child in call["children"]:
            c_off = child["offset"]
            for j, parent_local in enumerate(child_idx):
                edge_dst_l.append(off + parent_local)   # parent node row
                edge_src_l.append(c_off + j)            # child  node row
        e_cnt[l] = len(edge_dst_l) - e_start[l]

    n_edges = max(len(edge_dst_l), 1)
    edge_dst = np.zeros((n_edges,), np.int32)
    edge_src = np.zeros((n_edges,), np.int32)
    if edge_dst_l:
        edge_dst[:len(edge_dst_l)] = np.asarray(edge_dst_l, np.int32)
        edge_src[:len(edge_src_l)] = np.asarray(edge_src_l, np.int32)

    # A batch slot that is missing from at least one call contributes a zero row
    # to the max (exactly as the zero-initialized batch_node in the reference).
    absent_any = present < n_levels

    return dict(n_nodes=n_nodes, n_levels=n_levels, tokens=tokens,
                node_batch=node_batch, lvl_off=lvl_off, lvl_sz=lvl_sz,
                e_start=e_start, e_cnt=e_cnt, edge_dst=edge_dst,
                edge_src=edge_src, absent_any=absent_any)


# ------------------------------ Pallas kernel -------------------------------

def _make_tree_kernel(n_nodes, n_levels):
    def kernel(lvl_off, lvl_sz, e_start, e_cnt, e_dst, e_src, node_batch, tok,
               fused_ref, init_ref, out_ref, bc_ref):
        # 1) per-node projection == row gather from the fused (emb@W_c + b) table
        def gather(n, carry):
            bc_ref[pl.ds(n, 1), :] = fused_ref[pl.ds(tok[n], 1), :]
            return carry
        lax.fori_loop(0, n_nodes, gather, 0)

        # running max lives directly in the (bs_pad, 128) output block
        out_ref[...] = init_ref[...]

        # 2) post-order sweep over the flattened calls ("levels"):
        #    children rows were finalized in earlier levels, so the scatter-add
        #    here exactly reproduces zeros.index_copy(...) + add.
        def level_body(l, carry):
            e0 = e_start[l]

            def edge_body(j, c):
                e = e0 + j
                d = e_dst[e]
                s = e_src[e]
                bc_ref[pl.ds(d, 1), :] = (bc_ref[pl.ds(d, 1), :]
                                          + bc_ref[pl.ds(s, 1), :])
                return c
            lax.fori_loop(0, e_cnt[l], edge_body, 0)

            off = lvl_off[l]

            # batch_node.index_copy + running max over node_list, fused:
            def row_body(i, c):
                r = off + i
                b = node_batch[r]
                out_ref[pl.ds(b, 1), :] = jnp.maximum(out_ref[pl.ds(b, 1), :],
                                                      bc_ref[pl.ds(r, 1), :])
                return c
            lax.fori_loop(0, lvl_sz[l], row_body, 0)
            return carry
        lax.fori_loop(0, n_levels, level_body, 0)

    return kernel


@partial(jax.jit, static_argnames=("n_nodes", "n_levels", "n_pad", "bs_pad"))
def _device_forward(lvl_off, lvl_sz, e_start, e_cnt, e_dst, e_src,
                    node_batch, tok_p1, init_max,
                    emb_table, w_c, b_c,
                    *, n_nodes, n_levels, n_pad, bs_pad):
    # Fold embedding + W_c + bias into one tiny gather table (one-time GEMM).
    fused = jnp.dot(emb_table, w_c, preferred_element_type=jnp.float32) + b_c
    v_rows, c_real = fused.shape
    vp = _round_up(v_rows, 8)
    fused_pad = jnp.zeros((vp, C_PAD), jnp.float32).at[:v_rows, :c_real].set(fused)

    kernel = _make_tree_kernel(n_nodes, n_levels)
    out = pl.pallas_call(
        kernel,
        out_shape=jax.ShapeDtypeStruct((bs_pad, C_PAD), jnp.float32),
        grid_spec=pltpu.PrefetchScalarGridSpec(
            num_scalar_prefetch=8,
            grid=(1,),
            in_specs=[
                pl.BlockSpec((vp, C_PAD), lambda i, *prefetch: (0, 0)),
                pl.BlockSpec((bs_pad, C_PAD), lambda i, *prefetch: (0, 0)),
            ],
            out_specs=pl.BlockSpec((bs_pad, C_PAD), lambda i, *prefetch: (0, 0)),
            scratch_shapes=[pltpu.VMEM((n_pad, C_PAD), jnp.float32)],
        ),
        compiler_params=pltpu.CompilerParams(
            dimension_semantics=("arbitrary",)),
    )(lvl_off, lvl_sz, e_start, e_cnt, e_dst, e_src, node_batch, tok_p1,
      fused_pad, init_max)
    return out


def batch_tree_encoder_forward(x, bs, emb_table, w_c, b_c):
    # TODO(synk): the data-dependent recursive traversal itself has no Pallas
    # equivalent; it is flattened host-side into flat int32 tables and all the
    # dense math runs in a single fused Pallas kernel.
    t = build_tables(x, bs)
    n_nodes, n_levels = t["n_nodes"], t["n_levels"]
    n_pad = _round_up(max(n_nodes, 8), 8)
    bs_pad = _round_up(max(bs, 8), 8)

    # Exact node_list semantics: slots absent from some call see a zero row in
    # the max; slots present in every call must not be clamped to zero.
    init_max = np.zeros((bs_pad, C_PAD), np.float32)
    init_max[:bs, :] = np.where(t["absent_any"][:, None],
                                np.float32(0.0), np.float32(-np.inf))

    out = _device_forward(
        jnp.asarray(t["lvl_off"]), jnp.asarray(t["lvl_sz"]),
        jnp.asarray(t["e_start"]), jnp.asarray(t["e_cnt"]),
        jnp.asarray(t["edge_dst"]), jnp.asarray(t["edge_src"]),
        jnp.asarray(t["node_batch"]), jnp.asarray(t["tokens"] + 1),
        jnp.asarray(init_max),
        emb_table, w_c, b_c,
        n_nodes=n_nodes, n_levels=n_levels, n_pad=n_pad, bs_pad=bs_pad)
    return out[:bs, :ENCODE_DIM]


# -------------------------- pure-numpy reference ---------------------------

def ref_traverse(node, batch_index, emb_table, w, b, bs, node_list):
    size = len(node)
    if not size:
        return None
    current_node = [node[i][0] for i in range(size)]
    children_index, children = [], []
    for i in range(size):
        temp = node[i][1:]
        for j in range(len(temp)):
            if temp[j][0] != -1:
                if len(children_index) <= j:
                    children_index.append([i])
                    children.append([temp[j]])
                else:
                    children_index[j].append(i)
                    children[j].append(temp[j])
    batch_current = emb_table[np.asarray(current_node) + 1] @ w + b
    for c in range(len(children)):
        bci = [batch_index[i] for i in children_index[c]]
        tree = ref_traverse(children[c], bci, emb_table, w, b, bs, node_list)
        if tree is not None:
            z = np.zeros((size, w.shape[1]), np.float32)
            z[np.asarray(children_index[c])] = tree
            batch_current = batch_current + z
    bn = np.zeros((bs, w.shape[1]), np.float32)
    bn[np.asarray(batch_index)] = batch_current
    node_list.append(bn)
    return batch_current


# --------------------------------- main ------------------------------------

if __name__ == "__main__":
    key = jax.random.PRNGKey(0)
    k_emb, k_w, k_b = jax.random.split(key, 3)
    # nn.Embedding(vocab_size + 1, embedding_dim), nn.Linear(embedding_dim, encode_dim)
    emb_table = jax.random.normal(k_emb, (VOCAB_SIZE + 1, EMBEDDING_DIM), jnp.float32)
    w_c = jax.random.normal(k_w, (EMBEDDING_DIM, ENCODE_DIM), jnp.float32) * 0.1
    b_c = jax.random.normal(k_b, (ENCODE_DIM,), jnp.float32) * 0.1

    bs = 2
    # node format: [token, child, child, ...]; child token == -1 means "stop".
    x = [
        [3, [5, [2], [7]], [1]],
        [4, [6], [-1], [2, [8]]],
    ]

    out = batch_tree_encoder_forward(x, bs, emb_table, w_c, b_c)
    out = jax.block_until_ready(out)
    assert out.shape == (bs, ENCODE_DIM)

    ref_node_list = []
    ref_traverse(x, list(range(bs)), np.asarray(emb_table), np.asarray(w_c),
                 np.asarray(b_c), bs, ref_node_list)
    ref = np.max(np.stack(ref_node_list), axis=0)
    np.testing.assert_allclose(np.asarray(out), ref, rtol=1e-4, atol=1e-4)

    print("KERNEL_OK")
</pallas_src>

<mosaic_0001>
module attributes {stable_mosaic.version = 11 : i64} {
  func.func @kernel(%arg0: i32, %arg1: memref<7xi32, #tpu.memory_space<smem>>, %arg2: memref<7xi32, #tpu.memory_space<smem>>, %arg3: memref<7xi32, #tpu.memory_space<smem>>, %arg4: memref<7xi32, #tpu.memory_space<smem>>, %arg5: memref<7xi32, #tpu.memory_space<smem>>, %arg6: memref<7xi32, #tpu.memory_space<smem>>, %arg7: memref<9xi32, #tpu.memory_space<smem>>, %arg8: memref<9xi32, #tpu.memory_space<smem>>, %arg9: memref<24x128xf32, #tpu.memory_space<vmem>>, %arg10: memref<8x128xf32, #tpu.memory_space<vmem>>, %arg11: memref<8x128xf32, #tpu.memory_space<vmem>>, %arg12: memref<16x128xf32, #tpu.memory_space<vmem>>) attributes {dimension_semantics = [#tpu.dimension_semantics<arbitrary>], iteration_bounds = array<i64: 1>, scalar_prefetch = 8 : i64, scratch_operands = 1 : i64, tpu.core_type = #tpu.core_type<tc>, window_params = [{pipeline_mode = #tpu.pipeline_mode<synchronous>, transform_indices = @transform_0, window_bounds = array<i64: 24, 128>}, {pipeline_mode = #tpu.pipeline_mode<synchronous>, transform_indices = @transform_1, window_bounds = array<i64: 8, 128>}, {pipeline_mode = #tpu.pipeline_mode<synchronous>, transform_indices = @transform_2, window_bounds = array<i64: 8, 128>}]} {
    %c0_i32 = arith.constant 0 : i32
    %c9_i32 = arith.constant 9 : i32
    %0 = arith.addi %c0_i32, %c9_i32 : i32
    %c1_i32 = arith.constant 1 : i32
    scf.for %arg13 = %c0_i32 to %0 step %c1_i32  : i32 {
      %4 = arith.index_cast %arg13 : i32 to index
      %5 = memref.load %arg8[%4] : memref<9xi32, #tpu.memory_space<smem>>
      %6 = arith.index_cast %5 : i32 to index
      %c0_7 = arith.constant 0 : index
      %7 = vector.load %arg9[%6, %c0_7] : memref<24x128xf32, #tpu.memory_space<vmem>>, vector<1x128xf32>
      %8 = arith.index_cast %arg13 : i32 to index
      %c0_8 = arith.constant 0 : index
      %9 = vector.load %arg12[%8, %c0_8] : memref<16x128xf32, #tpu.memory_space<vmem>>, vector<1x128xf32>
      tpu.vector_store %arg12[%8, %c0_8], %7 {strides = array<i32>} : memref<16x128xf32, #tpu.memory_space<vmem>>, vector<1x128xf32>,
    }
    %c9_i32_0 = arith.constant 9 : i32
    %c0 = arith.constant 0 : index
    %c0_1 = arith.constant 0 : index
    %1 = vector.load %arg10[%c0, %c0_1] : memref<8x128xf32, #tpu.memory_space<vmem>>, vector<8x128xf32>
    %c0_2 = arith.constant 0 : index
    %c0_3 = arith.constant 0 : index
    %2 = vector.load %arg11[%c0_2, %c0_3] : memref<8x128xf32, #tpu.memory_space<vmem>>, vector<8x128xf32>
    tpu.vector_store %arg11[%c0_2, %c0_3], %1 {strides = array<i32>} : memref<8x128xf32, #tpu.memory_space<vmem>>, vector<8x128xf32>,
    %c0_i32_4 = arith.constant 0 : i32
    %c7_i32 = arith.constant 7 : i32
    %3 = arith.addi %c0_i32_4, %c7_i32 : i32
    %c1_i32_5 = arith.constant 1 : i32
    scf.for %arg13 = %c0_i32_4 to %3 step %c1_i32_5  : i32 {
      %4 = arith.index_cast %arg13 : i32 to index
      %5 = memref.load %arg3[%4] : memref<7xi32, #tpu.memory_space<smem>>
      %6 = arith.index_cast %arg13 : i32 to index
      %7 = memref.load %arg4[%6] : memref<7xi32, #tpu.memory_space<smem>>
      %c0_i32_7 = arith.constant 0 : i32
      %c0_i32_8 = arith.constant 0 : i32
      %8 = arith.subi %7, %c0_i32_8 : i32
      %9 = arith.addi %c0_i32_8, %8 : i32
      %c1_i32_9 = arith.constant 1 : i32
      scf.for %arg14 = %c0_i32_8 to %9 step %c1_i32_9  : i32 {
        %16 = arith.addi %5, %arg14 : i32
        %17 = arith.index_cast %16 : i32 to index
        %18 = memref.load %arg5[%17] : memref<7xi32, #tpu.memory_space<smem>>
        %19 = arith.index_cast %16 : i32 to index
        %20 = memref.load %arg6[%19] : memref<7xi32, #tpu.memory_space<smem>>
        %21 = arith.index_cast %18 : i32 to index
        %c0_13 = arith.constant 0 : index
        %22 = vector.load %arg12[%21, %c0_13] : memref<16x128xf32, #tpu.memory_space<vmem>>, vector<1x128xf32>
        %23 = arith.index_cast %20 : i32 to index
        %c0_14 = arith.constant 0 : index
        %24 = vector.load %arg12[%23, %c0_14] : memref<16x128xf32, #tpu.memory_space<vmem>>, vector<1x128xf32>
        %25 = arith.addf %22, %24 : vector<1x128xf32>
        %26 = arith.index_cast %18 : i32 to index
        %c0_15 = arith.constant 0 : index
        %27 = vector.load %arg12[%26, %c0_15] : memref<16x128xf32, #tpu.memory_space<vmem>>, vector<1x128xf32>
        tpu.vector_store %arg12[%26, %c0_15], %25 {strides = array<i32>} : memref<16x128xf32, #tpu.memory_space<vmem>>, vector<1x128xf32>,
      }
      %10 = arith.index_cast %arg13 : i32 to index
      %11 = memref.load %arg1[%10] : memref<7xi32, #tpu.memory_space<smem>>
      %12 = arith.index_cast %arg13 : i32 to index
      %13 = memref.load %arg2[%12] : memref<7xi32, #tpu.memory_space<smem>>
      %c0_i32_10 = arith.constant 0 : i32
      %c0_i32_11 = arith.constant 0 : i32
      %14 = arith.subi %13, %c0_i32_11 : i32
      %15 = arith.addi %c0_i32_11, %14 : i32
      %c1_i32_12 = arith.constant 1 : i32
      scf.for %arg14 = %c0_i32_11 to %15 step %c1_i32_12  : i32 {
        %16 = arith.addi %11, %arg14 : i32
        %17 = arith.index_cast %16 : i32 to index
        %18 = memref.load %arg7[%17] : memref<9xi32, #tpu.memory_space<smem>>
        %19 = arith.index_cast %18 : i32 to index
        %c0_13 = arith.constant 0 : index
        %20 = vector.load %arg11[%19, %c0_13] : memref<8x128xf32, #tpu.memory_space<vmem>>, vector<1x128xf32>
        %21 = arith.index_cast %16 : i32 to index
        %c0_14 = arith.constant 0 : index
        %22 = vector.load %arg12[%21, %c0_14] : memref<16x128xf32, #tpu.memory_space<vmem>>, vector<1x128xf32>
        %23 = arith.maximumf %20, %22 : vector<1x128xf32>
        %24 = arith.index_cast %18 : i32 to index
        %c0_15 = arith.constant 0 : index
        %25 = vector.load %arg11[%24, %c0_15] : memref<8x128xf32, #tpu.memory_space<vmem>>, vector<1x128xf32>
        tpu.vector_store %arg11[%24, %c0_15], %23 {strides = array<i32>} : memref<8x128xf32, #tpu.memory_space<vmem>>, vector<1x128xf32>,
      }
    }
    %c7_i32_6 = arith.constant 7 : i32
    return
  }
  func.func @transform_0(%arg0: i32, %arg1: memref<7xi32, #tpu.memory_space<smem>>, %arg2: memref<7xi32, #tpu.memory_space<smem>>, %arg3: memref<7xi32, #tpu.memory_space<smem>>, %arg4: memref<7xi32, #tpu.memory_space<smem>>, %arg5: memref<7xi32, #tpu.memory_space<smem>>, %arg6: memref<7xi32, #tpu.memory_space<smem>>, %arg7: memref<9xi32, #tpu.memory_space<smem>>, %arg8: memref<9xi32, #tpu.memory_space<smem>>) -> (i32, i32) {
    %c0_i32 = arith.constant 0 : i32
    %c0_i32_0 = arith.constant 0 : i32
    %c0_i32_1 = arith.constant 0 : i32
    return %c0_i32, %c0_i32_0 : i32, i32
  }
  func.func @transform_1(%arg0: i32, %arg1: memref<7xi32, #tpu.memory_space<smem>>, %arg2: memref<7xi32, #tpu.memory_space<smem>>, %arg3: memref<7xi32, #tpu.memory_space<smem>>, %arg4: memref<7xi32, #tpu.memory_space<smem>>, %arg5: memref<7xi32, #tpu.memory_space<smem>>, %arg6: memref<7xi32, #tpu.memory_space<smem>>, %arg7: memref<9xi32, #tpu.memory_space<smem>>, %arg8: memref<9xi32, #tpu.memory_space<smem>>) -> (i32, i32) {
    %c0_i32 = arith.constant 0 : i32
    %c0_i32_0 = arith.constant 0 : i32
    %c0_i32_1 = arith.constant 0 : i32
    return %c0_i32, %c0_i32_0 : i32, i32
  }
  func.func @transform_2(%arg0: i32, %arg1: memref<7xi32, #tpu.memory_space<smem>>, %arg2: memref<7xi32, #tpu.memory_space<smem>>, %arg3: memref<7xi32, #tpu.memory_space<smem>>, %arg4: memref<7xi32, #tpu.memory_space<smem>>, %arg5: memref<7xi32, #tpu.memory_space<smem>>, %arg6: memref<7xi32, #tpu.memory_space<smem>>, %arg7: memref<9xi32, #tpu.memory_space<smem>>, %arg8: memref<9xi32, #tpu.memory_space<smem>>) -> (i32, i32) {
    %c0_i32 = arith.constant 0 : i32
    %c0_i32_0 = arith.constant 0 : i32
    %c0_i32_1 = arith.constant 0 : i32
    return %c0_i32, %c0_i32_0 : i32, i32
  }
}

</mosaic_0001>

<llo_original>
// kernel: _device_forward.1
$region0: #{_device_forward.1}
  #allocation0 [shape = 'u32[]', space=smem, size = 0x4, offset = 0x4, fixed_abs, tag = 'smem constant byte address 0x4 - core index']
  #allocation1 [shape = 'u32[144,128]{1,0:T(1,128)}', space=vmem, size = 0x12000, scoped, tag = 'internal scratch']
  #allocation2 [shape = 'f32[16,128]{1,0:T(8,128)}', space=vmem, size = 0x2000, scoped, tag = 'scratch operand']
  #allocation3 [shape = 's32[1]{0}', space=sflag, size = 0x4, scoped, tag = 'scoped memory for _device_forward.1']
  #allocation4 [shape = 'u8[512]{0}', space=smem, size = 0x200, scoped, tag = 'prefetched SMEM operand 0']
  #allocation5 [shape = 'u8[512]{0}', space=smem, size = 0x200, scoped, tag = 'prefetched SMEM operand 1']
  #allocation6 [shape = 'u8[512]{0}', space=smem, size = 0x200, scoped, tag = 'prefetched SMEM operand 2']
  #allocation7 [shape = 'u8[512]{0}', space=smem, size = 0x200, scoped, tag = 'prefetched SMEM operand 3']
  #allocation8 [shape = 'u8[512]{0}', space=smem, size = 0x200, scoped, tag = 'prefetched SMEM operand 4']
  #allocation9 [shape = 'u8[512]{0}', space=smem, size = 0x200, scoped, tag = 'prefetched SMEM operand 5']
  #allocation10 [shape = 'u8[512]{0}', space=smem, size = 0x200, scoped, tag = 'prefetched SMEM operand 6']
  #allocation11 [shape = 'u8[512]{0}', space=smem, size = 0x200, scoped, tag = 'prefetched SMEM operand 7']
  %s0 = inlined_call_operand.vmem [shape: s32[7], index: 0, kind: input, shape index: {}]
  %s1 = inlined_call_operand.vmem [shape: s32[7], index: 1, kind: input, shape index: {}]
  %s2 = inlined_call_operand.vmem [shape: s32[7], index: 2, kind: input, shape index: {}]
  %s3 = inlined_call_operand.vmem [shape: s32[7], index: 3, kind: input, shape index: {}]
  %s4 = inlined_call_operand.vmem [shape: s32[7], index: 4, kind: input, shape index: {}]
  %s5 = inlined_call_operand.vmem [shape: s32[7], index: 5, kind: input, shape index: {}]
  %s6 = inlined_call_operand.vmem [shape: s32[9], index: 6, kind: input, shape index: {}]
  %s7 = inlined_call_operand.vmem [shape: s32[9], index: 7, kind: input, shape index: {}]
  %s8 = inlined_call_operand.vmem [shape: f32[24,128], index: 8, kind: input, shape index: {}]
  %s9 = inlined_call_operand.vmem [shape: f32[8,128], index: 9, kind: input, shape index: {}]
  %s10 = inlined_call_operand.hbm [shape: f32[8,128], index: 10, kind: output, shape index: {}]
  %s11 = sld [smem:[#allocation0]]
  $region46: #{_device_forward.1} parent=0
    _
  %s13 = ssub.s32 1, %s11
  %s14 = scalar_select 0, %s13, %s11
  %s15 = sshll.u32 %s0, 4
  %s16 = int_to_ptr.vmem [resolvable:$true] %s15
  %18 = dma.vmem_to_smem %s16, 16, [#allocation4], [#allocation3]
  %s19 = sshll.u32 %s1, 4
  %s20 = int_to_ptr.vmem [resolvable:$true] %s19
  %22 = dma.vmem_to_smem %s20, 16, [#allocation5], [#allocation3]
  %s23 = sshll.u32 %s2, 4
  %s24 = int_to_ptr.vmem [resolvable:$true] %s23
  %26 = dma.vmem_to_smem %s24, 16, [#allocation6], [#allocation3]
  %s27 = sshll.u32 %s3, 4
  %s28 = int_to_ptr.vmem [resolvable:$true] %s27
  %30 = dma.vmem_to_smem %s28, 16, [#allocation7], [#allocation3]
  %s31 = sshll.u32 %s4, 4
  %s32 = int_to_ptr.vmem [resolvable:$true] %s31
  %34 = dma.vmem_to_smem %s32, 16, [#allocation8], [#allocation3]
  %s35 = sshll.u32 %s5, 4
  %s36 = int_to_ptr.vmem [resolvable:$true] %s35
  %38 = dma.vmem_to_smem %s36, 16, [#allocation9], [#allocation3]
  %s39 = sshll.u32 %s6, 4
  %s40 = int_to_ptr.vmem [resolvable:$true] %s39
  %42 = dma.vmem_to_smem %s40, 16, [#allocation10], [#allocation3]
  %s43 = sshll.u32 %s7, 4
  %s44 = int_to_ptr.vmem [resolvable:$true] %s43
  %46 = dma.vmem_to_smem %s44, 16, [#allocation11], [#allocation3]
  %47 = dma.done [#allocation3], 128
  %48 = sfence
  $region1: #{_device_forward.1} parent=0
    #allocation12 [shape = 'u8[4096]{0}', space=vmem, size = 0x1000, scoped, tag = 'output window, operand 0, single buffered']
    #allocation13 [shape = 's32[1]{0}', space=sflag, size = 0x4, scoped, tag = 'scoped memory for _device_forward.1']
    %49 = vsyncpa [#allocation13], 0
    // Predicated region
    $region2: #{_device_forward.1} parent=1 // pred_check
      _
    $region3: #{_device_forward.1} parent=1 // pred_check_branch
      %51 = sbr.rel (0) target = $region5
    $region4: #{_device_forward.1} parent=1 // pred_region
      _
    $region5: #{_device_forward.1} parent=1 // pred_fallthru
      _
    // Predicated region
    $region6: #{_device_forward.1} parent=1 // pred_check
      _
    $region7: #{_device_forward.1} parent=1 // pred_check_branch
      %53 = sbr.rel (0) target = $region9
    $region8: #{_device_forward.1} parent=1 // pred_region
      _
    $region9: #{_device_forward.1} parent=1 // pred_fallthru
      _
    loop: start=0, step=1, limit=9
    $region10: #{_device_forward.1} parent=1 // loop_pre_header
      _
    $region11: #{_device_forward.1} parent=1 // loop_header
      %s55 = sphi 0, %s59
      %p56 = scmp.ge.s32.totalorder %s55, 9
    $region12: #{_device_forward.1} parent=1 // loop_header_branch
      %58 = sbr.rel (%p56) target = $region16
    $region13: #{_device_forward.1} parent=1 // loop_body
      %s60 = sld [smem:[#allocation11 + %s55]]
      %s61 = scalar_lea.vmem %s8, %s60
      %v62 = vld [vmem:[%s61] sm:$0x1]
      %s63 = scalar_lea.vmem [#allocation2], %s55
      %64 = vst [vmem:[%s63] sm:$0x1] %v62
    $region14: #{_device_forward.1} parent=1 // loop_footer
      %s59 = sadd.s32 1, %s55
    $region15: #{_device_forward.1} parent=1 // loop_footer_branch
      %54 = sbr.rel target = $region11
    $region16: #{_device_forward.1} parent=1 // loop_exit
      _
    %v65 = vld [vmem:[%s9] sm:$0xff]
    %66 = vst [vmem:[#allocation12] sm:$0xff] %v65
    loop: start=0, step=1, limit=7
    $region17: #{_device_forward.1} parent=1 // loop_pre_header
      _
    $region18: #{_device_forward.1} parent=1 // loop_header
      %s68 = sphi 0, %s72
      %p69 = scmp.ge.s32.totalorder %s68, 7
    $region19: #{_device_forward.1} parent=1 // loop_header_branch
      %71 = sbr.rel (%p69) target = $region23
    $region20: #{_device_forward.1} parent=1 // loop_body
      %s73 = sld [smem:[#allocation6 + %s68]]
      %s74 = sld [smem:[#allocation7 + %s68]]
      // While loop
      $region24: #{_device_forward.1} parent=20 // loop_pre_header
        _
      $region25: #{_device_forward.1} parent=20 // loop_header
        %s76 = sphi 0, %s78
        %p77 = scmp.ge.s32.totalorder %s76, %s74
      $region26: #{_device_forward.1} parent=20 // loop_header_branch
        %80 = sbr.rel (%p77) target = $region30
      $region27: #{_device_forward.1} parent=20 // loop_body
        %s81 = sadd.s32 %s73, %s76
        %s82 = sld [smem:[#allocation8 + %s81]]
        %s83 = sld [smem:[#allocation9 + %s81]]
        %s84 = scalar_lea.vmem [#allocation2], %s82
        %v85 = vld [vmem:[%s84] sm:$0x1]
        %s86 = scalar_lea.vmem [#allocation2], %s83
        %v87 = vld [vmem:[%s86] sm:$0x1]
        %v88 = vadd.f32 %v85, %v87
        %89 = vst [vmem:[%s84] sm:$0x1] %v88
      $region28: #{_device_forward.1} parent=20 // loop_footer
        %s78 = sadd.s32 %s76, 1
      $region29: #{_device_forward.1} parent=20 // loop_footer_branch
        %75 = sbr.rel target = $region25
      $region30: #{_device_forward.1} parent=20 // loop_exit
        _
      %s90 = sld [smem:[#allocation4 + %s68]]
      %s91 = sld [smem:[#allocation5 + %s68]]
      // While loop
      $region31: #{_device_forward.1} parent=20 // loop_pre_header
        _
      $region32: #{_device_forward.1} parent=20 // loop_header
        %s93 = sphi 0, %s95
        %p94 = scmp.ge.s32.totalorder %s93, %s91
      $region33: #{_device_forward.1} parent=20 // loop_header_branch
        %97 = sbr.rel (%p94) target = $region37
      $region34: #{_device_forward.1} parent=20 // loop_body
        %s98 = sadd.s32 %s90, %s93
        %s99 = sld [smem:[#allocation10 + %s98]]
        %s100 = scalar_lea.vmem [#allocation12], %s99
        %v101 = vld [vmem:[%s100] sm:$0x1]
        %s102 = scalar_lea.vmem [#allocation2], %s98
        %v103 = vld [vmem:[%s102] sm:$0x1]
        %v104 = vmax.f32 %v101, %v103
        %105 = vst [vmem:[%s100] sm:$0x1] %v104
      $region35: #{_device_forward.1} parent=20 // loop_footer
        %s95 = sadd.s32 %s93, 1
      $region36: #{_device_forward.1} parent=20 // loop_footer_branch
        %92 = sbr.rel target = $region32
      $region37: #{_device_forward.1} parent=20 // loop_exit
        _
    $region21: #{_device_forward.1} parent=1 // loop_footer
      %s72 = sadd.s32 1, %s68
    $region22: #{_device_forward.1} parent=1 // loop_footer_branch
      %67 = sbr.rel target = $region18
    $region23: #{_device_forward.1} parent=1 // loop_exit
      _
    // Predicated region
    $region38: #{_device_forward.1} parent=1 // pred_check
      _
    $region39: #{_device_forward.1} parent=1 // pred_check_branch
      %107 = sbr.rel (0) target = $region41
    $region40: #{_device_forward.1} parent=1 // pred_region
      %s109 = ssub.s32 128, 128
      %110 = vsyncadd [#allocation13], %s109
      %s112 = sshll.u32 [#allocation12], 4
      %s113 = int_to_ptr.vmem [resolvable:$true] %s112
      %115 = dma.vmem_to_hbm [thread:$0]  %s113, 128, %s10, [#allocation13]
    $region41: #{_device_forward.1} parent=1 // pred_fallthru
      _
    // Predicated region
    $region42: #{_device_forward.1} parent=1 // pred_check
      _
    $region43: #{_device_forward.1} parent=1 // pred_check_branch
      %117 = sbr.rel (0) target = $region45
    $region44: #{_device_forward.1} parent=1 // pred_region
      %118 = dma.done [#allocation13], 128
    $region45: #{_device_forward.1} parent=1 // pred_fallthru
      _
    %119 = vsyncpa [#allocation13], 1

</llo_original>
